<compile_context>
chip_gen: v6e
topology: v6e:2x2x1
jax: 0.10.0
libtpu: 0.0.40
codegen_flags: <defaults>
</compile_context>

<pallas_src>
import functools

import jax
import jax.numpy as jnp
from jax import lax
from jax.experimental import pallas as pl
from jax.experimental.pallas import tpu as pltpu


def _round_up(x, m):
    return ((x + m - 1) // m) * m


def _vmem_capacity_bytes():
    """Physical VMEM per TensorCore; conservative (v7x) fallback."""
    try:
        cap = getattr(pltpu.get_tpu_info(), "vmem_capacity_bytes", None)
        if cap:
            return int(cap)
    except Exception:
        pass
    try:
        kind = jax.devices()[0].device_kind.lower()
        if "v5" in kind or "v6" in kind:
            return 128 * 1024 * 1024
    except Exception:
        pass
    return 64 * 1024 * 1024


def _default_tanh_dtype():
    """bf16 tanh on v6e/v7x (bf16 EUP); f32 on v5e / older / unknown."""
    try:
        kind = jax.devices()[0].device_kind.lower()
    except Exception:
        return jnp.float32
    if any(tag in kind for tag in ("v6", "v7", "tpu7")):
        return jnp.bfloat16
    return jnp.float32


def _pair_mlp_kernel(x_ref, w1_ref, b1_ref, w2_ref, b2_ref, w3_ref, b3_ref,
                     o_ref, acc_ref, *, nneighbor, needs_mask, tanh_dtype,
                     unroll):
    """Grid = (particle tiles [parallel], neighbour chunks [arbitrary]).

    x_ref : (J_CHUNK, d_in, P_TILE)  pair features, particles on lanes (bf16)
    w1_ref: (H, d_in)  w2_ref: (H, H)  -- bf16   w3_ref: (DIM, H) -- f32
    b*_ref: (rows, 1) f32 column biases
    o_ref : (DIM, P_TILE) f32 per-particle neighbour sums (written at j==last)
    acc_ref: (H, P_TILE) f32 VMEM scratch, resident across the neighbour axis
    """
    j = pl.program_id(1)
    j_chunk = x_ref.shape[0]
    nhidden, p_tile = acc_ref.shape

    @pl.when(j == 0)
    def _init():
        acc_ref[...] = jnp.zeros_like(acc_ref)

    w1 = w1_ref[...]
    w2 = w2_ref[...]
    mm_dtype = w1.dtype
    # Loop-invariant bias broadcasts hoisted out of the neighbour loop.
    b1b = jnp.broadcast_to(b1_ref[...], (nhidden, p_tile))
    b2b = jnp.broadcast_to(b2_ref[...], (nhidden, p_tile))

    def body(jj, carry):
        xj = x_ref[jj]                                         # (d_in, P) bf16
        h1 = jnp.tanh((jnp.dot(w1, xj, preferred_element_type=jnp.float32)
                       + b1b).astype(tanh_dtype)).astype(mm_dtype)
        h2 = jnp.tanh((jnp.dot(w2, h1, preferred_element_type=jnp.float32)
                       + b2b).astype(tanh_dtype))
        if needs_mask:
            # Last neighbour chunk may be padded; padded slabs contribute 0.
            valid = ((j * j_chunk + jj) < nneighbor).astype(jnp.float32)
            h2 = h2 * valid
        acc_ref[...] += h2.astype(jnp.float32)
        return carry

    lax.fori_loop(0, j_chunk, body, 0, unroll=unroll)

    @pl.when(j == pl.num_programs(1) - 1)
    def _finalize():
        # Layer 3 hoisted: sum_j (W3 h2_j + b3) = W3 (sum_j h2_j) + n*b3.
        y = jnp.dot(w3_ref[...], acc_ref[...],
                    preferred_element_type=jnp.float32)
        o_ref[...] = y + jnp.float32(nneighbor) * b3_ref[...]


def pair_wise_mlp_forward(data, params, nparticle, DIM, *,
                          compute_dtype=jnp.bfloat16, tanh_dtype=None,
                          p_tile=None, j_chunk=None):
    """data: (nparticle*(nparticle-1), MLP_input) -> (nparticle, DIM) f32.

    Assumes the standard pair ordering: the (nparticle-1) pairs of particle p
    occupy rows [p*(nparticle-1), (p+1)*(nparticle-1)) of `data` (same
    invariant the original module's reshape relies on).
    """
    w1, b1, w2, b2, w3, b3 = params
    assert nparticle >= 2
    nneighbor = nparticle - 1
    n_pairs = nparticle * nneighbor
    d_in, nhidden = w1.shape
    assert data.shape == (n_pairs, d_in)
    assert w3.shape == (nhidden, DIM)

    if tanh_dtype is None:
        tanh_dtype = _default_tanh_dtype()

    itemsize = jnp.dtype(compute_dtype).itemsize
    sublane_pack = 32 // itemsize            # 8 for f32, 16 for bf16
    d_in_pad = _round_up(d_in, sublane_pack)  # real in-VMEM sublane footprint

    vmem_cap = _vmem_capacity_bytes()
    vmem_limit = int(vmem_cap * 3 // 4)       # 96 MiB (128-MiB parts) / 48 MiB (v7x)
    per_buf_cap = int(vmem_cap * 3 // 16)     # ~24 MiB / ~12 MiB per data buffer

    # ---- particle (lane) tile: multiple of 128; >=2 tiles when possible so the
    #      "parallel" axis can be split over v7x's two TensorCores.
    p_full = _round_up(nparticle, 128)
    if p_tile is None:
        p_tile = 512
    p_tile = min(_round_up(p_tile, 128), p_full)
    if p_full >= 256:
        p_tile = min(p_tile, max(128, (p_full // 2) // 128 * 128))
    p_pad = _round_up(nparticle, p_tile)
    n_tiles = p_pad // p_tile

    # ---- neighbour chunk: bounds the streamed VMEM block independent of
    #      nparticle (uses the sublane-padded d_in).
    if j_chunk is None:
        bytes_per_neighbor = d_in_pad * p_tile * itemsize
        j_chunk = min(nneighbor, max(1, per_buf_cap // bytes_per_neighbor), 64)
    j_chunk = int(max(1, min(j_chunk, nneighbor)))
    j_pad = _round_up(nneighbor, j_chunk)
    n_j = j_pad // j_chunk
    needs_mask = (j_pad != nneighbor)

    # ---- lane-dense layout: particles on lanes, neighbours on the chunked axis.
    x = data.reshape(nparticle, nneighbor, d_in)
    x = jnp.pad(x, ((0, p_pad - nparticle), (0, j_pad - nneighbor), (0, 0)))
    x_t = jnp.transpose(x, (1, 2, 0)).astype(compute_dtype)   # (Jpad, Din, Ppad)

    # ---- weights: bf16 MXU operands for the per-neighbour layers, f32 for the
    #      once-per-tile hoisted layer 3; f32 column biases.
    w1t = w1.T.astype(compute_dtype)                            # (H, Din)
    w2t = w2.T.astype(compute_dtype)                            # (H, H)
    w3t = w3.T.astype(jnp.float32)                              # (DIM, H)
    b1c = b1.reshape(nhidden, 1).astype(jnp.float32)
    b2c = b2.reshape(nhidden, 1).astype(jnp.float32)
    b3c = b3.reshape(DIM, 1).astype(jnp.float32)

    kernel = functools.partial(
        _pair_mlp_kernel, nneighbor=nneighbor, needs_mask=needs_mask,
        tanh_dtype=tanh_dtype, unroll=int(min(4, j_chunk)))

    const = lambda i, j: (0, 0)
    out_t = pl.pallas_call(
        kernel,
        out_shape=jax.ShapeDtypeStruct((DIM, p_pad), jnp.float32),
        grid_spec=pltpu.PrefetchScalarGridSpec(
            num_scalar_prefetch=0,
            grid=(n_tiles, n_j),
            in_specs=[
                pl.BlockSpec((j_chunk, d_in, p_tile), lambda i, j: (j, 0, i)),
                pl.BlockSpec((nhidden, d_in), const),
                pl.BlockSpec((nhidden, 1), const),
                pl.BlockSpec((nhidden, nhidden), const),
                pl.BlockSpec((nhidden, 1), const),
                pl.BlockSpec((DIM, nhidden), const),
                pl.BlockSpec((DIM, 1), const),
            ],
            out_specs=pl.BlockSpec((DIM, p_tile), lambda i, j: (0, i)),
            scratch_shapes=[pltpu.VMEM((nhidden, p_tile), jnp.float32)],
        ),
        compiler_params=pltpu.CompilerParams(
            dimension_semantics=("parallel", "arbitrary"),
            vmem_limit_bytes=vmem_limit,
        ),
    )(x_t, w1t, b1c, w2t, b2c, w3t, b3c)

    # drop particle padding, back to (nparticle, DIM)
    return out_t[:, :nparticle].T


def init_params(key, mlp_input, nhidden, out_dim=2):
    """Deterministic init mimicking torch.nn.Linear default U(-1/sqrt(fan_in), .)."""
    ks = jax.random.split(key, 6)

    def linear(kw, kb, fan_in, fan_out):
        bound = 1.0 / jnp.sqrt(fan_in)
        w = jax.random.uniform(kw, (fan_in, fan_out), jnp.float32, -bound, bound)
        b = jax.random.uniform(kb, (fan_out,), jnp.float32, -bound, bound)
        return w, b

    w1, b1 = linear(ks[0], ks[1], mlp_input, nhidden)
    w2, b2 = linear(ks[2], ks[3], nhidden, nhidden)
    w3, b3 = linear(ks[4], ks[5], nhidden, out_dim)
    return (w1, b1, w2, b2, w3, b3)


def reference_forward(data, params, nparticle, DIM, *,
                      compute_dtype=jnp.bfloat16, tanh_dtype=jnp.float32):
    """Pure-JAX reference mirroring the kernel's quantization points."""
    w1, b1, w2, b2, w3, b3 = params
    f32 = jnp.float32
    x = data.astype(compute_dtype)
    h1 = jnp.tanh((jnp.dot(x, w1.astype(compute_dtype),
                           preferred_element_type=f32) + b1
                   ).astype(tanh_dtype)).astype(compute_dtype)
    h2 = jnp.tanh((jnp.dot(h1, w2.astype(compute_dtype),
                           preferred_element_type=f32) + b2
                   ).astype(tanh_dtype)).astype(f32)
    y = jnp.dot(h2, w3.astype(f32)) + b3
    return y.reshape(nparticle, nparticle - 1, DIM).sum(axis=1)


if __name__ == "__main__":
    MLP_input, MLP_nhidden, DIM = 5, 32, 2
    key = jax.random.PRNGKey(0)
    k_data, k_param, k_data2 = jax.random.split(key, 3)
    params = init_params(k_param, MLP_input, MLP_nhidden, out_dim=DIM)

    tanh_dtype = _default_tanh_dtype()
    tol = (dict(atol=1e-4, rtol=1e-4) if tanh_dtype == jnp.float32
           else dict(atol=5e-2, rtol=1e-2))

    # ---- Test 1: module-consistent small shapes (nparticle=4, DIM=2) --------
    nparticle = 4
    n_pairs = nparticle * (nparticle - 1)
    data = jax.random.normal(k_data, (n_pairs, MLP_input), dtype=jnp.float32)
    out = jax.block_until_ready(
        pair_wise_mlp_forward(data, params, nparticle, DIM))
    ref = reference_forward(data, params, nparticle, DIM, tanh_dtype=tanh_dtype)
    assert out.shape == (nparticle, DIM)
    err = float(jnp.max(jnp.abs(out - ref)))
    assert jnp.allclose(out, ref, **tol), f"test1 max_abs_err={err}"

    # ---- Test 2: multiple particle tiles + chunked / masked neighbour axis --
    nparticle2 = 260
    n_pairs2 = nparticle2 * (nparticle2 - 1)
    data2 = jax.random.normal(k_data2, (n_pairs2, MLP_input), dtype=jnp.float32)
    out2 = jax.block_until_ready(
        pair_wise_mlp_forward(data2, params, nparticle2, DIM))
    ref2 = reference_forward(data2, params, nparticle2, DIM,
                             tanh_dtype=tanh_dtype)
    assert out2.shape == (nparticle2, DIM)
    err2 = float(jnp.max(jnp.abs(out2 - ref2)))
    assert jnp.allclose(out2, ref2, **tol), f"test2 max_abs_err={err2}"

    print("KERNEL_OK")
</pallas_src>

<mosaic_0001>
module attributes {stable_mosaic.version = 11 : i64} {
  func.func @_pair_mlp_kernel(%arg0: i32, %arg1: i32, %arg2: memref<3x5x128xbf16, #tpu.memory_space<vmem>>, %arg3: memref<32x5xbf16, #tpu.memory_space<vmem>>, %arg4: memref<32x1xf32, #tpu.memory_space<vmem>>, %arg5: memref<32x32xbf16, #tpu.memory_space<vmem>>, %arg6: memref<32x1xf32, #tpu.memory_space<vmem>>, %arg7: memref<2x32xf32, #tpu.memory_space<vmem>>, %arg8: memref<2x1xf32, #tpu.memory_space<vmem>>, %arg9: memref<2x128xf32, #tpu.memory_space<vmem>>, %arg10: memref<32x128xf32, #tpu.memory_space<vmem>>) attributes {dimension_semantics = [#tpu.dimension_semantics<parallel>, #tpu.dimension_semantics<arbitrary>], iteration_bounds = array<i64: 1, 1>, scalar_prefetch = 0 : i64, scratch_operands = 1 : i64, tpu.core_type = #tpu.core_type<tc>, window_params = [{transform_indices = @transform_0, window_bounds = array<i64: 3, 5, 128>}, {pipeline_mode = #tpu.pipeline_mode<synchronous>, transform_indices = @transform_1, window_bounds = array<i64: 32, 5>}, {pipeline_mode = #tpu.pipeline_mode<synchronous>, transform_indices = @transform_2, window_bounds = array<i64: 32, 1>}, {pipeline_mode = #tpu.pipeline_mode<synchronous>, transform_indices = @transform_3, window_bounds = array<i64: 32, 32>}, {pipeline_mode = #tpu.pipeline_mode<synchronous>, transform_indices = @transform_4, window_bounds = array<i64: 32, 1>}, {pipeline_mode = #tpu.pipeline_mode<synchronous>, transform_indices = @transform_5, window_bounds = array<i64: 2, 32>}, {pipeline_mode = #tpu.pipeline_mode<synchronous>, transform_indices = @transform_6, window_bounds = array<i64: 2, 1>}, {transform_indices = @transform_7, window_bounds = array<i64: 2, 128>}]} {
    %c0_i32 = arith.constant 0 : i32
    %0 = arith.cmpi eq, %arg1, %c0_i32 : i32
    %1 = arith.extui %0 : i1 to i32
    %c0_i32_0 = arith.constant 0 : i32
    %2 = arith.cmpi ne, %1, %c0_i32_0 : i32
    scf.if %2 {
      %cst_34 = arith.constant 0.000000e+00 : f32
      %53 = vector.broadcast %cst_34 : f32 to vector<32x128xf32>
      %c0_35 = arith.constant 0 : index
      %c0_36 = arith.constant 0 : index
      %54 = vector.load %arg10[%c0_35, %c0_36] : memref<32x128xf32, #tpu.memory_space<vmem>>, vector<32x128xf32>
      tpu.vector_store %arg10[%c0_35, %c0_36], %53 {strides = array<i32>} : memref<32x128xf32, #tpu.memory_space<vmem>>, vector<32x128xf32>,
    } else {
    }
    %c0 = arith.constant 0 : index
    %c0_1 = arith.constant 0 : index
    %3 = vector.load %arg3[%c0, %c0_1] : memref<32x5xbf16, #tpu.memory_space<vmem>>, vector<32x5xbf16>
    %c0_2 = arith.constant 0 : index
    %c0_3 = arith.constant 0 : index
    %4 = vector.load %arg5[%c0_2, %c0_3] : memref<32x32xbf16, #tpu.memory_space<vmem>>, vector<32x32xbf16>
    %c0_4 = arith.constant 0 : index
    %c0_5 = arith.constant 0 : index
    %5 = vector.load %arg4[%c0_4, %c0_5] : memref<32x1xf32, #tpu.memory_space<vmem>>, vector<32x1xf32>
    %6 = vector.shape_cast %5 : vector<32x1xf32> to vector<32x1xf32>
    %7 = vector.broadcast %6 : vector<32x1xf32> to vector<32x128xf32>
    %c0_6 = arith.constant 0 : index
    %c0_7 = arith.constant 0 : index
    %8 = vector.load %arg6[%c0_6, %c0_7] : memref<32x1xf32, #tpu.memory_space<vmem>>, vector<32x1xf32>
    %9 = vector.shape_cast %8 : vector<32x1xf32> to vector<32x1xf32>
    %10 = vector.broadcast %9 : vector<32x1xf32> to vector<32x128xf32>
    %c0_i32_8 = arith.constant 0 : i32
    %11 = arith.index_cast %c0_i32_8 : i32 to index
    %c0_9 = arith.constant 0 : index
    %c0_10 = arith.constant 0 : index
    %12 = vector.load %arg2[%11, %c0_9, %c0_10] : memref<3x5x128xbf16, #tpu.memory_space<vmem>>, vector<1x5x128xbf16>
    %13 = vector.shape_cast %12 : vector<1x5x128xbf16> to vector<5x128xbf16>
    %cst = arith.constant dense<0.000000e+00> : vector<32x128xf32>
    %14 = tpu.matmul %3, %13, %cst {dimension_numbers = #tpu.dot_dimension_numbers<[1], [0], [0], [1], [0, 0, 1, 1], [], []>} : vector<32x5xbf16>, vector<5x128xbf16>, vector<32x128xf32> -> vector<32x128xf32>
    %15 = arith.addf %14, %7 : vector<32x128xf32>
    %16 = math.tanh %15 : vector<32x128xf32>
    %17 = arith.truncf %16 : vector<32x128xf32> to vector<32x128xbf16>
    %cst_11 = arith.constant dense<0.000000e+00> : vector<32x128xf32>
    %18 = tpu.matmul %4, %17, %cst_11 {dimension_numbers = #tpu.dot_dimension_numbers<[1], [0], [0], [1], [0, 0, 1, 1], [], []>} : vector<32x32xbf16>, vector<32x128xbf16>, vector<32x128xf32> -> vector<32x128xf32>
    %19 = arith.addf %18, %10 : vector<32x128xf32>
    %20 = math.tanh %19 : vector<32x128xf32>
    %c0_12 = arith.constant 0 : index
    %c0_13 = arith.constant 0 : index
    %21 = vector.load %arg10[%c0_12, %c0_13] : memref<32x128xf32, #tpu.memory_space<vmem>>, vector<32x128xf32>
    %22 = arith.addf %21, %20 : vector<32x128xf32>
    %c0_14 = arith.constant 0 : index
    %c0_15 = arith.constant 0 : index
    %23 = vector.load %arg10[%c0_14, %c0_15] : memref<32x128xf32, #tpu.memory_space<vmem>>, vector<32x128xf32>
    tpu.vector_store %arg10[%c0_14, %c0_15], %22 {strides = array<i32>} : memref<32x128xf32, #tpu.memory_space<vmem>>, vector<32x128xf32>,
    %c1_i32 = arith.constant 1 : i32
    %24 = arith.index_cast %c1_i32 : i32 to index
    %c0_16 = arith.constant 0 : index
    %c0_17 = arith.constant 0 : index
    %25 = vector.load %arg2[%24, %c0_16, %c0_17] : memref<3x5x128xbf16, #tpu.memory_space<vmem>>, vector<1x5x128xbf16>
    %26 = vector.shape_cast %25 : vector<1x5x128xbf16> to vector<5x128xbf16>
    %cst_18 = arith.constant dense<0.000000e+00> : vector<32x128xf32>
    %27 = tpu.matmul %3, %26, %cst_18 {dimension_numbers = #tpu.dot_dimension_numbers<[1], [0], [0], [1], [0, 0, 1, 1], [], []>} : vector<32x5xbf16>, vector<5x128xbf16>, vector<32x128xf32> -> vector<32x128xf32>
    %28 = arith.addf %27, %7 : vector<32x128xf32>
    %29 = math.tanh %28 : vector<32x128xf32>
    %30 = arith.truncf %29 : vector<32x128xf32> to vector<32x128xbf16>
    %cst_19 = arith.constant dense<0.000000e+00> : vector<32x128xf32>
    %31 = tpu.matmul %4, %30, %cst_19 {dimension_numbers = #tpu.dot_dimension_numbers<[1], [0], [0], [1], [0, 0, 1, 1], [], []>} : vector<32x32xbf16>, vector<32x128xbf16>, vector<32x128xf32> -> vector<32x128xf32>
    %32 = arith.addf %31, %10 : vector<32x128xf32>
    %33 = math.tanh %32 : vector<32x128xf32>
    %c0_20 = arith.constant 0 : index
    %c0_21 = arith.constant 0 : index
    %34 = vector.load %arg10[%c0_20, %c0_21] : memref<32x128xf32, #tpu.memory_space<vmem>>, vector<32x128xf32>
    %35 = arith.addf %34, %33 : vector<32x128xf32>
    %c0_22 = arith.constant 0 : index
    %c0_23 = arith.constant 0 : index
    %36 = vector.load %arg10[%c0_22, %c0_23] : memref<32x128xf32, #tpu.memory_space<vmem>>, vector<32x128xf32>
    tpu.vector_store %arg10[%c0_22, %c0_23], %35 {strides = array<i32>} : memref<32x128xf32, #tpu.memory_space<vmem>>, vector<32x128xf32>,
    %c2_i32 = arith.constant 2 : i32
    %37 = arith.index_cast %c2_i32 : i32 to index
    %c0_24 = arith.constant 0 : index
    %c0_25 = arith.constant 0 : index
    %38 = vector.load %arg2[%37, %c0_24, %c0_25] : memref<3x5x128xbf16, #tpu.memory_space<vmem>>, vector<1x5x128xbf16>
    %39 = vector.shape_cast %38 : vector<1x5x128xbf16> to vector<5x128xbf16>
    %cst_26 = arith.constant dense<0.000000e+00> : vector<32x128xf32>
    %40 = tpu.matmul %3, %39, %cst_26 {dimension_numbers = #tpu.dot_dimension_numbers<[1], [0], [0], [1], [0, 0, 1, 1], [], []>} : vector<32x5xbf16>, vector<5x128xbf16>, vector<32x128xf32> -> vector<32x128xf32>
    %41 = arith.addf %40, %7 : vector<32x128xf32>
    %42 = math.tanh %41 : vector<32x128xf32>
    %43 = arith.truncf %42 : vector<32x128xf32> to vector<32x128xbf16>
    %cst_27 = arith.constant dense<0.000000e+00> : vector<32x128xf32>
    %44 = tpu.matmul %4, %43, %cst_27 {dimension_numbers = #tpu.dot_dimension_numbers<[1], [0], [0], [1], [0, 0, 1, 1], [], []>} : vector<32x32xbf16>, vector<32x128xbf16>, vector<32x128xf32> -> vector<32x128xf32>
    %45 = arith.addf %44, %10 : vector<32x128xf32>
    %46 = math.tanh %45 : vector<32x128xf32>
    %c0_28 = arith.constant 0 : index
    %c0_29 = arith.constant 0 : index
    %47 = vector.load %arg10[%c0_28, %c0_29] : memref<32x128xf32, #tpu.memory_space<vmem>>, vector<32x128xf32>
    %48 = arith.addf %47, %46 : vector<32x128xf32>
    %c0_30 = arith.constant 0 : index
    %c0_31 = arith.constant 0 : index
    %49 = vector.load %arg10[%c0_30, %c0_31] : memref<32x128xf32, #tpu.memory_space<vmem>>, vector<32x128xf32>
    tpu.vector_store %arg10[%c0_30, %c0_31], %48 {strides = array<i32>} : memref<32x128xf32, #tpu.memory_space<vmem>>, vector<32x128xf32>,
    %c3_i32 = arith.constant 3 : i32
    %c0_i32_32 = arith.constant 0 : i32
    %50 = arith.cmpi eq, %arg1, %c0_i32_32 : i32
    %51 = arith.extui %50 : i1 to i32
    %c0_i32_33 = arith.constant 0 : i32
    %52 = arith.cmpi ne, %51, %c0_i32_33 : i32
    scf.if %52 {
      %c0_34 = arith.constant 0 : index
      %c0_35 = arith.constant 0 : index
      %53 = vector.load %arg7[%c0_34, %c0_35] : memref<2x32xf32, #tpu.memory_space<vmem>>, vector<2x32xf32>
      %c0_36 = arith.constant 0 : index
      %c0_37 = arith.constant 0 : index
      %54 = vector.load %arg10[%c0_36, %c0_37] : memref<32x128xf32, #tpu.memory_space<vmem>>, vector<32x128xf32>
      %cst_38 = arith.constant dense<0.000000e+00> : vector<2x128xf32>
      %55 = tpu.matmul %53, %54, %cst_38 {dimension_numbers = #tpu.dot_dimension_numbers<[1], [0], [0], [1], [0, 0, 1, 1], [], []>} : vector<2x32xf32>, vector<32x128xf32>, vector<2x128xf32> -> vector<2x128xf32>
      %c0_39 = arith.constant 0 : index
      %c0_40 = arith.constant 0 : index
      %56 = vector.load %arg8[%c0_39, %c0_40] : memref<2x1xf32, #tpu.memory_space<vmem>>, vector<2x1xf32>
      %cst_41 = arith.constant 3.000000e+00 : f32
      %57 = vector.broadcast %cst_41 : f32 to vector<2x1xf32>
      %58 = arith.mulf %57, %56 : vector<2x1xf32>
      %59 = vector.broadcast %58 : vector<2x1xf32> to vector<2x128xf32>
      %60 = arith.addf %55, %59 : vector<2x128xf32>
      %c0_42 = arith.constant 0 : index
      %c0_43 = arith.constant 0 : index
      %61 = vector.load %arg9[%c0_42, %c0_43] : memref<2x128xf32, #tpu.memory_space<vmem>>, vector<2x128xf32>
      tpu.vector_store %arg9[%c0_42, %c0_43], %60 {strides = array<i32>} : memref<2x128xf32, #tpu.memory_space<vmem>>, vector<2x128xf32>,
    } else {
    }
    return
  }
  func.func @transform_0(%arg0: i32, %arg1: i32) -> (i32, i32, i32) {
    %c0_i32 = arith.constant 0 : i32
    %c0_i32_0 = arith.constant 0 : i32
    return %arg1, %c0_i32, %arg0 : i32, i32, i32
  }
  func.func @transform_1(%arg0: i32, %arg1: i32) -> (i32, i32) {
    %c0_i32 = arith.constant 0 : i32
    %c0_i32_0 = arith.constant 0 : i32
    %c0_i32_1 = arith.constant 0 : i32
    return %c0_i32, %c0_i32_0 : i32, i32
  }
  func.func @transform_2(%arg0: i32, %arg1: i32) -> (i32, i32) {
    %c0_i32 = arith.constant 0 : i32
    %c0_i32_0 = arith.constant 0 : i32
    %c0_i32_1 = arith.constant 0 : i32
    return %c0_i32, %c0_i32_0 : i32, i32
  }
  func.func @transform_3(%arg0: i32, %arg1: i32) -> (i32, i32) {
    %c0_i32 = arith.constant 0 : i32
    %c0_i32_0 = arith.constant 0 : i32
    %c0_i32_1 = arith.constant 0 : i32
    return %c0_i32, %c0_i32_0 : i32, i32
  }
  func.func @transform_4(%arg0: i32, %arg1: i32) -> (i32, i32) {
    %c0_i32 = arith.constant 0 : i32
    %c0_i32_0 = arith.constant 0 : i32
    %c0_i32_1 = arith.constant 0 : i32
    return %c0_i32, %c0_i32_0 : i32, i32
  }
  func.func @transform_5(%arg0: i32, %arg1: i32) -> (i32, i32) {
    %c0_i32 = arith.constant 0 : i32
    %c0_i32_0 = arith.constant 0 : i32
    %c0_i32_1 = arith.constant 0 : i32
    return %c0_i32, %c0_i32_0 : i32, i32
  }
  func.func @transform_6(%arg0: i32, %arg1: i32) -> (i32, i32) {
    %c0_i32 = arith.constant 0 : i32
    %c0_i32_0 = arith.constant 0 : i32
    %c0_i32_1 = arith.constant 0 : i32
    return %c0_i32, %c0_i32_0 : i32, i32
  }
  func.func @transform_7(%arg0: i32, %arg1: i32) -> (i32, i32) {
    %c0_i32 = arith.constant 0 : i32
    %c0_i32_0 = arith.constant 0 : i32
    return %c0_i32, %arg0 : i32, i32
  }
}

</mosaic_0001>

<llo_original>
// kernel: tpu_custom_call.1
$region0: #{tpu_custom_call.1}
  #allocation0 [shape = 'u32[]', space=smem, size = 0x4, offset = 0x4, fixed_abs, tag = 'smem constant byte address 0x4 - core index']
  #allocation1 [shape = 'u32[144,128]{1,0:T(1,128)}', space=vmem, size = 0x12000, scoped, tag = 'internal scratch']
  #allocation2 [shape = 'f32[32,128]{1,0:T(8,128)}', space=vmem, size = 0x4000, scoped, tag = 'scratch operand']
  %s0 = inlined_call_operand.vmem [shape: bf16[3,5,128], index: 0, kind: input, shape index: {}]
  %s1 = inlined_call_operand.vmem [shape: bf16[32,5], index: 1, kind: input, shape index: {}]
  %s2 = inlined_call_operand.vmem [shape: f32[32,1], index: 2, kind: input, shape index: {}]
  %s3 = inlined_call_operand.vmem [shape: bf16[32,32], index: 3, kind: input, shape index: {}]
  %s4 = inlined_call_operand.vmem [shape: f32[32,1], index: 4, kind: input, shape index: {}]
  %s5 = inlined_call_operand.vmem [shape: f32[2,32], index: 5, kind: input, shape index: {}]
  %s6 = inlined_call_operand.vmem [shape: f32[2,1], index: 6, kind: input, shape index: {}]
  %s7 = inlined_call_operand.hbm [shape: f32[2,128], index: 7, kind: output, shape index: {}]
  %s8 = sld [smem:[#allocation0]]
  $region46: #{tpu_custom_call.1} parent=0
    _
  %s10 = ssub.s32 1, %s8
  %s11 = scalar_select 0, %s10, %s8
  $region1: #{tpu_custom_call.1} parent=0
    #allocation3 [shape = 'u8[1024]{0}', space=vmem, size = 0x400, scoped, tag = 'output window, operand 0, single buffered']
    #allocation4 [shape = 's32[1]{0}', space=sflag, size = 0x4, scoped, tag = 'scoped memory for tpu_custom_call.1']
    %12 = vsyncpa [#allocation4], 0
    // Predicated region
    $region2: #{tpu_custom_call.1} parent=1 // pred_check
      _
    $region3: #{tpu_custom_call.1} parent=1 // pred_check_branch
      %14 = sbr.rel (0) target = $region5
    $region4: #{tpu_custom_call.1} parent=1 // pred_region
      _
    $region5: #{tpu_custom_call.1} parent=1 // pred_fallthru
      _
    // Predicated region
    $region6: #{tpu_custom_call.1} parent=1 // pred_check
      _
    $region7: #{tpu_custom_call.1} parent=1 // pred_check_branch
      %16 = sbr.rel (0) target = $region9
    $region8: #{tpu_custom_call.1} parent=1 // pred_region
      _
    $region9: #{tpu_custom_call.1} parent=1 // pred_fallthru
      _
    // Predicated region
    $region10: #{tpu_custom_call.1} parent=1 // pred_check
      _
    $region11: #{tpu_custom_call.1} parent=1 // pred_check_branch
      %18 = sbr.rel (0) target = $region13
    $region12: #{tpu_custom_call.1} parent=1 // pred_region
      _
    $region13: #{tpu_custom_call.1} parent=1 // pred_fallthru
      _
    // Predicated region
    $region14: #{tpu_custom_call.1} parent=1 // pred_check
      _
    $region15: #{tpu_custom_call.1} parent=1 // pred_check_branch
      %20 = sbr.rel (0) target = $region17
    $region16: #{tpu_custom_call.1} parent=1 // pred_region
      _
    $region17: #{tpu_custom_call.1} parent=1 // pred_fallthru
      _
    // Predicated region
    $region18: #{tpu_custom_call.1} parent=1 // pred_check
      _
    $region19: #{tpu_custom_call.1} parent=1 // pred_check_branch
      %22 = sbr.rel (0) target = $region21
    $region20: #{tpu_custom_call.1} parent=1 // pred_region
      _
    $region21: #{tpu_custom_call.1} parent=1 // pred_fallthru
      _
    // Predicated region
    $region22: #{tpu_custom_call.1} parent=1 // pred_check
      _
    $region23: #{tpu_custom_call.1} parent=1 // pred_check_branch
      %24 = sbr.rel (0) target = $region25
    $region24: #{tpu_custom_call.1} parent=1 // pred_region
      _
    $region25: #{tpu_custom_call.1} parent=1 // pred_fallthru
      _
    // Predicated region
    $region26: #{tpu_custom_call.1} parent=1 // pred_check
      _
    $region27: #{tpu_custom_call.1} parent=1 // pred_check_branch
      %26 = sbr.rel (0) target = $region29
    $region28: #{tpu_custom_call.1} parent=1 // pred_region
      _
    $region29: #{tpu_custom_call.1} parent=1 // pred_fallthru
      _
    %p28 = scmp.eq.s32.totalorder 0, 0
    // Predicated region
    $region30: #{tpu_custom_call.1} parent=1 // pred_check
      %p29 = pneg %p28
    $region31: #{tpu_custom_call.1} parent=1 // pred_check_branch
      %31 = sbr.rel (%p29) target = $region33
    $region32: #{tpu_custom_call.1} parent=1 // pred_region
      %32 = vst [vmem:[#allocation2] sm:$0xff] 0.0
      %33 = vst [vmem:[#allocation2 + $0x8] sm:$0xff] 0.0
      %34 = vst [vmem:[#allocation2 + $0x10] sm:$0xff] 0.0
      %35 = vst [vmem:[#allocation2 + $0x18] sm:$0xff] 0.0
    $region33: #{tpu_custom_call.1} parent=1 // pred_fallthru
      _
    %v36 = vld [vmem:[%s1] sm:$0xf]
    %v37 = vld [vmem:[%s1 + $0x4] sm:$0xf]
    %v38 = vld [vmem:[%s1 + $0x8] sm:$0xf]
    %v39 = vld [vmem:[%s1 + $0xc] sm:$0xf]
    %v40 = vld [vmem:[%s3] sm:$0xf]
    %v41 = vld [vmem:[%s3 + $0x4] sm:$0xf]
    %v42 = vld [vmem:[%s3 + $0x8] sm:$0xf]
    %v43 = vld [vmem:[%s3 + $0xc] sm:$0xf]
    %v44 = vld [vmem:[%s2] sm:$0xff]
    %v45 = vld [vmem:[%s2 + $0x8] sm:$0xff]
    %v46 = vld [vmem:[%s2 + $0x10] sm:$0xff]
    %v47 = vld [vmem:[%s2 + $0x18] sm:$0xff]
    %49 = vset.pattern.permute.xlu0 0
    %50 = vperm.xlu0 %49, %v44
    %v51 = vpop.permute.xlu0 %50
    %54 = vset.pattern.permute.xlu0 0
    %55 = vperm.xlu0 %54, %v45
    %v56 = vpop.permute.xlu0 %55
    %59 = vset.pattern.permute.xlu0 0
    %60 = vperm.xlu0 %59, %v46
    %v61 = vpop.permute.xlu0 %60
    %64 = vset.pattern.permute.xlu0 0
    %65 = vperm.xlu0 %64, %v47
    %v66 = vpop.permute.xlu0 %65
    %v68 = vld [vmem:[%s4] sm:$0xff]
    %v69 = vld [vmem:[%s4 + $0x8] sm:$0xff]
    %v70 = vld [vmem:[%s4 + $0x10] sm:$0xff]
    %v71 = vld [vmem:[%s4 + $0x18] sm:$0xff]
    %73 = vset.pattern.permute.xlu0 0
    %74 = vperm.xlu0 %73, %v68
    %v75 = vpop.permute.xlu0 %74
    %78 = vset.pattern.permute.xlu0 0
    %79 = vperm.xlu0 %78, %v69
    %v80 = vpop.permute.xlu0 %79
    %83 = vset.pattern.permute.xlu0 0
    %84 = vperm.xlu0 %83, %v70
    %v85 = vpop.permute.xlu0 %84
    %88 = vset.pattern.permute.xlu0 0
    %89 = vperm.xlu0 %88, %v71
    %v90 = vpop.permute.xlu0 %89
    %v92 = vld [vmem:[%s0] sm:$0x7]
    %v97 = vunpack.c.l.b16 %v36
    %v98 = vunpack.c.l.b16 %v37
    %v99 = vunpack.c.l.b16 %v38
    %v100 = vunpack.c.l.b16 %v39
    %v101 = vpack.c.b16 %v98, %v97
    %v102 = vpack.c.b16 %v100, %v99
    %vm103 = vcmask 39936
    %v105 = vsel %vm103, %v101, 0
    %v108 = vsel %vm103, %v102, 0
    %vm110 = vcmask 1041408
    %vm111 = vcmask 1042432
    %v112 = vsel %vm110, 4294967295, 65535
    %v113 = vsel %vm111, %v112, 0
    %v115 = vand.u32 %v92, %v113
    %117 = vmatprep.subr.bf16.mxu0 0
    %118 = vmatpush1.bf16.msra.mxu0 0
    %119 = vmatprep.subr.bf16.mxu0 0
    %120 = vmatpush1.bf16.msra.mxu0 0
    %121 = vmatprep.subr.bf16.mxu0 0
    %122 = vmatpush1.bf16.msra.mxu0 0
    %123 = vmatprep.subr.bf16.mxu0 0
    %124 = vmatpush1.bf16.msra.mxu0 0
    %125 = vmatprep.subr.bf16.mxu0 0
    %126 = vmatpush1.bf16.msra.mxu0 0
    %127 = vmatprep.subr.bf16.mxu0 0
    %128 = vmatpush1.bf16.msra.mxu0 0
    %129 = vmatprep.subr.bf16.mxu0 0
    %130 = vmatpush1.bf16.msra.mxu0 0
    %131 = vmatprep.subr.bf16.mxu0 0
    %132 = vmatpush1.bf16.msra.mxu0 %v115
    %133 = vmatprep.subr.bf16.mxu0 0
    %134 = vmatpush2.bf16.msra.mxu0 0
    %135 = vmatprep.subr.bf16.mxu0 0
    %136 = vmatpush2.bf16.msra.mxu0 0
    %137 = vmatprep.subr.bf16.mxu0 0
    %138 = vmatpush2.bf16.msra.mxu0 0
    %139 = vmatprep.subr.bf16.mxu0 0
    %140 = vmatpush2.bf16.msra.mxu0 0
    %141 = vmatprep.subr.bf16.mxu0 0
    %142 = vmatpush2.bf16.msra.mxu0 0
    %143 = vmatprep.subr.bf16.mxu0 0
    %144 = vmatpush2.bf16.msra.mxu0 0
    %145 = vmatprep.subr.bf16.mxu0 0
    %146 = vmatpush2.bf16.msra.mxu0 0
    %147 = vmatprep.subr.bf16.mxu0 0
    %148 = vmatpush2.bf16.msra.mxu0 0
    %149 = vmatprep.mubr.bf16.mxu0 0
    %150 = vmatmul.mubr.bf16.gmra.mxu0 %v105
    %v151 = vpop.f32.mrf.mxu0
    %v152 = vadd.f32 %v51, %v151
    %v153 = vpop.f32.mrf.mxu0
    %v154 = vpop.f32.mrf.mxu0
    %v155 = vadd.f32 %v56, %v154
    %v156 = vpop.f32.mrf.mxu0
    %157 = vmatprep.mubr.bf16.mxu0 0
    %158 = vmatmul.mubr.bf16.gmra.mxu0 %v108
    %v159 = vpop.f32.mrf.mxu0
    %v160 = vadd.f32 %v61, %v159
    %v161 = vpop.f32.mrf.mxu0
    %v162 = vpop.f32.mrf.mxu0
    %v163 = vadd.f32 %v66, %v162
    %v164 = vpop.f32.mrf.mxu0
    %165 = vdwg.mxu0
    %v166 = vtanh.pop %v152
    %v167 = vtanh.pop %v155
    %v168 = vtanh.pop %v160
    %v169 = vtanh.pop %v163
    %v170 = vpack.c.bf16 %v167, %v166
    %v171 = vpack.c.bf16 %v169, %v168
    %v176 = vunpack.c.l.b16 %v40
    %v177 = vunpack.c.l.b16 %v41
    %v178 = vunpack.c.l.b16 %v42
    %v179 = vunpack.c.l.b16 %v43
    %v180 = vpack.c.b16 %v177, %v176
    %v181 = vpack.c.b16 %v179, %v178
    %vm182 = vcmask 261120
    %v184 = vsel %vm182, %v180, 0
    %v187 = vsel %vm182, %v181, 0
    %189 = vmatprep.subr.bf16.mxu0 0
    %190 = vmatpush1.bf16.msra.mxu0 0
    %191 = vmatprep.subr.bf16.mxu0 0
    %192 = vmatpush1.bf16.msra.mxu0 0
    %193 = vmatprep.subr.bf16.mxu0 0
    %194 = vmatpush1.bf16.msra.mxu0 0
    %195 = vmatprep.subr.bf16.mxu0 0
    %196 = vmatpush1.bf16.msra.mxu0 0
    %197 = vmatprep.subr.bf16.mxu0 0
    %198 = vmatpush1.bf16.msra.mxu0 0
    %199 = vmatprep.subr.bf16.mxu0 0
    %200 = vmatpush1.bf16.msra.mxu0 0
    %201 = vmatprep.subr.bf16.mxu0 0
    %202 = vmatpush1.bf16.msra.mxu0 %v171
    %203 = vmatprep.subr.bf16.mxu0 0
    %204 = vmatpush1.bf16.msra.mxu0 %v170
    %205 = vmatprep.subr.bf16.mxu0 0
    %206 = vmatpush2.bf16.msra.mxu0 0
    %207 = vmatprep.subr.bf16.mxu0 0
    %208 = vmatpush2.bf16.msra.mxu0 0
    %209 = vmatprep.subr.bf16.mxu0 0
    %210 = vmatpush2.bf16.msra.mxu0 0
    %211 = vmatprep.subr.bf16.mxu0 0
    %212 = vmatpush2.bf16.msra.mxu0 0
    %213 = vmatprep.subr.bf16.mxu0 0
    %214 = vmatpush2.bf16.msra.mxu0 0
    %215 = vmatprep.subr.bf16.mxu0 0
    %216 = vmatpush2.bf16.msra.mxu0 0
    %217 = vmatprep.subr.bf16.mxu0 0
    %218 = vmatpush2.bf16.msra.mxu0 0
    %219 = vmatprep.subr.bf16.mxu0 0
    %220 = vmatpush2.bf16.msra.mxu0 0
    %221 = vmatprep.mubr.bf16.mxu0 0
    %222 = vmatmul.mubr.bf16.gmra.mxu0 %v184
    %v223 = vpop.f32.mrf.mxu0
    %v224 = vadd.f32 %v75, %v223
    %v225 = vpop.f32.mrf.mxu0
    %v226 = vpop.f32.mrf.mxu0
    %v227 = vadd.f32 %v80, %v226
    %v228 = vpop.f32.mrf.mxu0
    %229 = vmatprep.mubr.bf16.mxu0 0
    %230 = vmatmul.mubr.bf16.gmra.mxu0 %v187
    %v231 = vpop.f32.mrf.mxu0
    %v232 = vadd.f32 %v85, %v231
    %v233 = vpop.f32.mrf.mxu0
    %v234 = vpop.f32.mrf.mxu0
    %v235 = vadd.f32 %v90, %v234
    %v236 = vpop.f32.mrf.mxu0
    %237 = vdwg.mxu0
    %v238 = vtanh.pop %v224
    %v239 = vtanh.pop %v227
    %v240 = vtanh.pop %v232
    %v241 = vtanh.pop %v235
    %v242 = vld [vmem:[#allocation2] sm:$0xff]
    %v243 = vld [vmem:[#allocation2 + $0x8] sm:$0xff]
    %v244 = vld [vmem:[#allocation2 + $0x10] sm:$0xff]
    %v245 = vld [vmem:[#allocation2 + $0x18] sm:$0xff]
    %v246 = vadd.f32 %v242, %v238
    %v247 = vadd.f32 %v243, %v239
    %v248 = vadd.f32 %v244, %v240
    %v249 = vadd.f32 %v245, %v241
    %250 = vst [vmem:[#allocation2] sm:$0xff] %v246
    %251 = vst [vmem:[#allocation2 + $0x8] sm:$0xff] %v247
    %252 = vst [vmem:[#allocation2 + $0x10] sm:$0xff] %v248
    %253 = vst [vmem:[#allocation2 + $0x18] sm:$0xff] %v249
    %s254 = scalar_lea.vmem %s0, 4
    %v255 = vld [vmem:[%s254] sm:$0x7]
    %v257 = vand.u32 %v255, %v113
    %259 = vmatprep.subr.bf16.mxu0 0
    %260 = vmatpush1.bf16.msra.mxu0 0
    %261 = vmatprep.subr.bf16.mxu0 0
    %262 = vmatpush1.bf16.msra.mxu0 0
    %263 = vmatprep.subr.bf16.mxu0 0
    %264 = vmatpush1.bf16.msra.mxu0 0
    %265 = vmatprep.subr.bf16.mxu0 0
    %266 = vmatpush1.bf16.msra.mxu0 0
    %267 = vmatprep.subr.bf16.mxu0 0
    %268 = vmatpush1.bf16.msra.mxu0 0
    %269 = vmatprep.subr.bf16.mxu0 0
    %270 = vmatpush1.bf16.msra.mxu0 0
    %271 = vmatprep.subr.bf16.mxu0 0
    %272 = vmatpush1.bf16.msra.mxu0 0
    %273 = vmatprep.subr.bf16.mxu0 0
    %274 = vmatpush1.bf16.msra.mxu0 %v257
    %275 = vmatprep.subr.bf16.mxu0 0
    %276 = vmatpush2.bf16.msra.mxu0 0
    %277 = vmatprep.subr.bf16.mxu0 0
    %278 = vmatpush2.bf16.msra.mxu0 0
    %279 = vmatprep.subr.bf16.mxu0 0
    %280 = vmatpush2.bf16.msra.mxu0 0
    %281 = vmatprep.subr.bf16.mxu0 0
    %282 = vmatpush2.bf16.msra.mxu0 0
    %283 = vmatprep.subr.bf16.mxu0 0
    %284 = vmatpush2.bf16.msra.mxu0 0
    %285 = vmatprep.subr.bf16.mxu0 0
    %286 = vmatpush2.bf16.msra.mxu0 0
    %287 = vmatprep.subr.bf16.mxu0 0
    %288 = vmatpush2.bf16.msra.mxu0 0
    %289 = vmatprep.subr.bf16.mxu0 0
    %290 = vmatpush2.bf16.msra.mxu0 0
    %291 = vmatprep.mubr.bf16.mxu0 0
    %292 = vmatmul.mubr.bf16.gmra.mxu0 %v105
    %v293 = vpop.f32.mrf.mxu0
    %v294 = vadd.f32 %v51, %v293
    %v295 = vpop.f32.mrf.mxu0
    %v296 = vpop.f32.mrf.mxu0
    %v297 = vadd.f32 %v56, %v296
    %v298 = vpop.f32.mrf.mxu0
    %299 = vmatprep.mubr.bf16.mxu0 0
    %300 = vmatmul.mubr.bf16.gmra.mxu0 %v108
    %v301 = vpop.f32.mrf.mxu0
    %v302 = vadd.f32 %v61, %v301
    %v303 = vpop.f32.mrf.mxu0
    %v304 = vpop.f32.mrf.mxu0
    %v305 = vadd.f32 %v66, %v304
    %v306 = vpop.f32.mrf.mxu0
    %307 = vdwg.mxu0
    %v308 = vtanh.pop %v294
    %v309 = vtanh.pop %v297
    %v310 = vtanh.pop %v302
    %v311 = vtanh.pop %v305
    %v312 = vpack.c.bf16 %v309, %v308
    %v313 = vpack.c.bf16 %v311, %v310
    %314 = vmatprep.subr.bf16.mxu0 0
    %315 = vmatpush1.bf16.msra.mxu0 0
    %316 = vmatprep.subr.bf16.mxu0 0
    %317 = vmatpush1.bf16.msra.mxu0 0
    %318 = vmatprep.subr.bf16.mxu0 0
    %319 = vmatpush1.bf16.msra.mxu0 0
    %320 = vmatprep.subr.bf16.mxu0 0
    %321 = vmatpush1.bf16.msra.mxu0 0
    %322 = vmatprep.subr.bf16.mxu0 0
    %323 = vmatpush1.bf16.msra.mxu0 0
    %324 = vmatprep.subr.bf16.mxu0 0
    %325 = vmatpush1.bf16.msra.mxu0 0
    %326 = vmatprep.subr.bf16.mxu0 0
    %327 = vmatpush1.bf16.msra.mxu0 %v313
    %328 = vmatprep.subr.bf16.mxu0 0
    %329 = vmatpush1.bf16.msra.mxu0 %v312
    %330 = vmatprep.subr.bf16.mxu0 0
    %331 = vmatpush2.bf16.msra.mxu0 0
    %332 = vmatprep.subr.bf16.mxu0 0
    %333 = vmatpush2.bf16.msra.mxu0 0
    %334 = vmatprep.subr.bf16.mxu0 0
    %335 = vmatpush2.bf16.msra.mxu0 0
    %336 = vmatprep.subr.bf16.mxu0 0
    %337 = vmatpush2.bf16.msra.mxu0 0
    %338 = vmatprep.subr.bf16.mxu0 0
    %339 = vmatpush2.bf16.msra.mxu0 0
    %340 = vmatprep.subr.bf16.mxu0 0
    %341 = vmatpush2.bf16.msra.mxu0 0
    %342 = vmatprep.subr.bf16.mxu0 0
    %343 = vmatpush2.bf16.msra.mxu0 0
    %344 = vmatprep.subr.bf16.mxu0 0
    %345 = vmatpush2.bf16.msra.mxu0 0
    %346 = vmatprep.mubr.bf16.mxu0 0
    %347 = vmatmul.mubr.bf16.gmra.mxu0 %v184
    %v348 = vpop.f32.mrf.mxu0
    %v349 = vadd.f32 %v75, %v348
    %v350 = vpop.f32.mrf.mxu0
    %v351 = vpop.f32.mrf.mxu0
    %v352 = vadd.f32 %v80, %v351
    %v353 = vpop.f32.mrf.mxu0
    %354 = vmatprep.mubr.bf16.mxu0 0
    %355 = vmatmul.mubr.bf16.gmra.mxu0 %v187
    %v356 = vpop.f32.mrf.mxu0
    %v357 = vadd.f32 %v85, %v356
    %v358 = vpop.f32.mrf.mxu0
    %v359 = vpop.f32.mrf.mxu0
    %v360 = vadd.f32 %v90, %v359
    %v361 = vpop.f32.mrf.mxu0
    %362 = vdwg.mxu0
    %v363 = vtanh.pop %v349
    %v364 = vtanh.pop %v352
    %v365 = vtanh.pop %v357
    %v366 = vtanh.pop %v360
    %v367 = vld [vmem:[#allocation2] sm:$0xff]
    %v368 = vld [vmem:[#allocation2 + $0x8] sm:$0xff]
    %v369 = vld [vmem:[#allocation2 + $0x10] sm:$0xff]
    %v370 = vld [vmem:[#allocation2 + $0x18] sm:$0xff]
    %v371 = vadd.f32 %v367, %v363
    %v372 = vadd.f32 %v368, %v364
    %v373 = vadd.f32 %v369, %v365
    %v374 = vadd.f32 %v370, %v366
    %375 = vst [vmem:[#allocation2] sm:$0xff] %v371
    %376 = vst [vmem:[#allocation2 + $0x8] sm:$0xff] %v372
    %377 = vst [vmem:[#allocation2 + $0x10] sm:$0xff] %v373
    %378 = vst [vmem:[#allocation2 + $0x18] sm:$0xff] %v374
    %s379 = scalar_lea.vmem %s0, 8
    %v380 = vld [vmem:[%s379] sm:$0x7]
    %v382 = vand.u32 %v380, %v113
    %384 = vmatprep.subr.bf16.mxu0 0
    %385 = vmatpush1.bf16.msra.mxu0 0
    %386 = vmatprep.subr.bf16.mxu0 0
    %387 = vmatpush1.bf16.msra.mxu0 0
    %388 = vmatprep.subr.bf16.mxu0 0
    %389 = vmatpush1.bf16.msra.mxu0 0
    %390 = vmatprep.subr.bf16.mxu0 0
    %391 = vmatpush1.bf16.msra.mxu0 0
    %392 = vmatprep.subr.bf16.mxu0 0
    %393 = vmatpush1.bf16.msra.mxu0 0
    %394 = vmatprep.subr.bf16.mxu0 0
    %395 = vmatpush1.bf16.msra.mxu0 0
    %396 = vmatprep.subr.bf16.mxu0 0
    %397 = vmatpush1.bf16.msra.mxu0 0
    %398 = vmatprep.subr.bf16.mxu0 0
    %399 = vmatpush1.bf16.msra.mxu0 %v382
    %400 = vmatprep.subr.bf16.mxu0 0
    %401 = vmatpush2.bf16.msra.mxu0 0
    %402 = vmatprep.subr.bf16.mxu0 0
    %403 = vmatpush2.bf16.msra.mxu0 0
    %404 = vmatprep.subr.bf16.mxu0 0
    %405 = vmatpush2.bf16.msra.mxu0 0
    %406 = vmatprep.subr.bf16.mxu0 0
    %407 = vmatpush2.bf16.msra.mxu0 0
    %408 = vmatprep.subr.bf16.mxu0 0
    %409 = vmatpush2.bf16.msra.mxu0 0
    %410 = vmatprep.subr.bf16.mxu0 0
    %411 = vmatpush2.bf16.msra.mxu0 0
    %412 = vmatprep.subr.bf16.mxu0 0
    %413 = vmatpush2.bf16.msra.mxu0 0
    %414 = vmatprep.subr.bf16.mxu0 0
    %415 = vmatpush2.bf16.msra.mxu0 0
    %416 = vmatprep.mubr.bf16.mxu0 0
    %417 = vmatmul.mubr.bf16.gmra.mxu0 %v105
    %v418 = vpop.f32.mrf.mxu0
    %v419 = vadd.f32 %v51, %v418
    %v420 = vpop.f32.mrf.mxu0
    %v421 = vpop.f32.mrf.mxu0
    %v422 = vadd.f32 %v56, %v421
    %v423 = vpop.f32.mrf.mxu0
    %424 = vmatprep.mubr.bf16.mxu0 0
    %425 = vmatmul.mubr.bf16.gmra.mxu0 %v108
    %v426 = vpop.f32.mrf.mxu0
    %v427 = vadd.f32 %v61, %v426
    %v428 = vpop.f32.mrf.mxu0
    %v429 = vpop.f32.mrf.mxu0
    %v430 = vadd.f32 %v66, %v429
    %v431 = vpop.f32.mrf.mxu0
    %432 = vdwg.mxu0
    %v433 = vtanh.pop %v419
    %v434 = vtanh.pop %v422
    %v435 = vtanh.pop %v427
    %v436 = vtanh.pop %v430
    %v437 = vpack.c.bf16 %v434, %v433
    %v438 = vpack.c.bf16 %v436, %v435
    %439 = vmatprep.subr.bf16.mxu0 0
    %440 = vmatpush1.bf16.msra.mxu0 0
    %441 = vmatprep.subr.bf16.mxu0 0
    %442 = vmatpush1.bf16.msra.mxu0 0
    %443 = vmatprep.subr.bf16.mxu0 0
    %444 = vmatpush1.bf16.msra.mxu0 0
    %445 = vmatprep.subr.bf16.mxu0 0
    %446 = vmatpush1.bf16.msra.mxu0 0
    %447 = vmatprep.subr.bf16.mxu0 0
    %448 = vmatpush1.bf16.msra.mxu0 0
    %449 = vmatprep.subr.bf16.mxu0 0
    %450 = vmatpush1.bf16.msra.mxu0 0
    %451 = vmatprep.subr.bf16.mxu0 0
    %452 = vmatpush1.bf16.msra.mxu0 %v438
    %453 = vmatprep.subr.bf16.mxu0 0
    %454 = vmatpush1.bf16.msra.mxu0 %v437
    %455 = vmatprep.subr.bf16.mxu0 0
    %456 = vmatpush2.bf16.msra.mxu0 0
    %457 = vmatprep.subr.bf16.mxu0 0
    %458 = vmatpush2.bf16.msra.mxu0 0
    %459 = vmatprep.subr.bf16.mxu0 0
    %460 = vmatpush2.bf16.msra.mxu0 0
    %461 = vmatprep.subr.bf16.mxu0 0
    %462 = vmatpush2.bf16.msra.mxu0 0
    %463 = vmatprep.subr.bf16.mxu0 0
    %464 = vmatpush2.bf16.msra.mxu0 0
    %465 = vmatprep.subr.bf16.mxu0 0
    %466 = vmatpush2.bf16.msra.mxu0 0
    %467 = vmatprep.subr.bf16.mxu0 0
    %468 = vmatpush2.bf16.msra.mxu0 0
    %469 = vmatprep.subr.bf16.mxu0 0
    %470 = vmatpush2.bf16.msra.mxu0 0
    %471 = vmatprep.mubr.bf16.mxu0 0
    %472 = vmatmul.mubr.bf16.gmra.mxu0 %v184
    %v473 = vpop.f32.mrf.mxu0
    %v474 = vadd.f32 %v75, %v473
    %v475 = vpop.f32.mrf.mxu0
    %v476 = vpop.f32.mrf.mxu0
    %v477 = vadd.f32 %v80, %v476
    %v478 = vpop.f32.mrf.mxu0
    %479 = vmatprep.mubr.bf16.mxu0 0
    %480 = vmatmul.mubr.bf16.gmra.mxu0 %v187
    %v481 = vpop.f32.mrf.mxu0
    %v482 = vadd.f32 %v85, %v481
    %v483 = vpop.f32.mrf.mxu0
    %v484 = vpop.f32.mrf.mxu0
    %v485 = vadd.f32 %v90, %v484
    %v486 = vpop.f32.mrf.mxu0
    %487 = vdwg.mxu0
    %v488 = vtanh.pop %v474
    %v489 = vtanh.pop %v477
    %v490 = vtanh.pop %v482
    %v491 = vtanh.pop %v485
    %v492 = vld [vmem:[#allocation2] sm:$0xff]
    %v493 = vld [vmem:[#allocation2 + $0x8] sm:$0xff]
    %v494 = vld [vmem:[#allocation2 + $0x10] sm:$0xff]
    %v495 = vld [vmem:[#allocation2 + $0x18] sm:$0xff]
    %v496 = vadd.f32 %v492, %v488
    %v497 = vadd.f32 %v493, %v489
    %v498 = vadd.f32 %v494, %v490
    %v499 = vadd.f32 %v495, %v491
    %500 = vst [vmem:[#allocation2] sm:$0xff] %v496
    %501 = vst [vmem:[#allocation2 + $0x8] sm:$0xff] %v497
    %502 = vst [vmem:[#allocation2 + $0x10] sm:$0xff] %v498
    %503 = vst [vmem:[#allocation2 + $0x18] sm:$0xff] %v499
    // Predicated region
    $region34: #{tpu_custom_call.1} parent=1 // pred_check
      %p504 = pneg %p28
    $region35: #{tpu_custom_call.1} parent=1 // pred_check_branch
      %506 = sbr.rel (%p504) target = $region37
    $region36: #{tpu_custom_call.1} parent=1 // pred_region
      %v507 = vld [vmem:[%s5] sm:$0x3]
      %v508 = vld [vmem:[#allocation2] sm:$0xff]
      %v509 = vld [vmem:[#allocation2 + $0x8] sm:$0xff]
      %v510 = vld [vmem:[#allocation2 + $0x10] sm:$0xff]
      %v511 = vld [vmem:[#allocation2 + $0x18] sm:$0xff]
      %v512 = vld [vmem:[%s6] sm:$0x3]
      %v513 = vmul.f32 %v512, 3.0
      %515 = vset.pattern.permute.xlu0 0
      %516 = vperm.xlu0 %515, %v513
      %v517 = vpop.permute.xlu0 %516
      %v520 = vsel %vm182, %v507, 0
      %522 = vmatprep.subr.mxu0 0.0
      %523 = vmatpush1.msra.mxu0 0.0
      %524 = vmatprep.subr.mxu0 0.0
      %525 = vmatpush1.msra.mxu0 0.0
      %526 = vmatprep.subr.mxu0 0.0
      %527 = vmatpush1.msra.mxu0 0.0
      %528 = vmatprep.subr.mxu0 0.0
      %529 = vmatpush1.msra.mxu0 0.0
      %530 = vmatprep.subr.mxu0 0.0
      %531 = vmatpush1.msra.mxu0 0.0
      %532 = vmatprep.subr.mxu0 0.0
      %533 = vmatpush1.msra.mxu0 0.0
      %534 = vmatprep.subr.mxu0 0.0
      %535 = vmatpush1.msra.mxu0 0.0
      %536 = vmatprep.subr.mxu0 0.0
      %537 = vmatpush1.msra.mxu0 0.0
      %538 = vmatprep.subr.mxu0 0.0
      %539 = vmatpush1.msra.mxu0 0.0
      %540 = vmatprep.subr.mxu0 0.0
      %541 = vmatpush1.msra.mxu0 0.0
      %542 = vmatprep.subr.mxu0 0.0
      %543 = vmatpush1.msra.mxu0 0.0
      %544 = vmatprep.subr.mxu0 0.0
      %545 = vmatpush1.msra.mxu0 0.0
      %546 = vmatprep.subr.mxu0 0.0
      %547 = vmatpush1.msra.mxu0 %v511
      %548 = vmatprep.subr.mxu0 0.0
      %549 = vmatpush1.msra.mxu0 %v510
      %550 = vmatprep.subr.mxu0 0.0
      %551 = vmatpush1.msra.mxu0 %v509
      %552 = vmatprep.subr.mxu0 0.0
      %553 = vmatpush1.msra.mxu0 %v508
      %554 = vmatprep.subr.mxu0 0.0
      %555 = vmatpush2.msra.mxu0 0.0
      %556 = vmatprep.subr.mxu0 0.0
      %557 = vmatpush2.msra.mxu0 0.0
      %558 = vmatprep.subr.mxu0 0.0
      %559 = vmatpush2.msra.mxu0 0.0
      %560 = vmatprep.subr.mxu0 0.0
      %561 = vmatpush2.msra.mxu0 0.0
      %562 = vmatprep.subr.mxu0 0.0
      %563 = vmatpush2.msra.mxu0 0.0
      %564 = vmatprep.subr.mxu0 0.0
      %565 = vmatpush2.msra.mxu0 0.0
      %566 = vmatprep.subr.mxu0 0.0
      %567 = vmatpush2.msra.mxu0 0.0
      %568 = vmatprep.subr.mxu0 0.0
      %569 = vmatpush2.msra.mxu0 0.0
      %570 = vmatprep.subr.mxu0 0.0
      %571 = vmatpush2.msra.mxu0 0.0
      %572 = vmatprep.subr.mxu0 0.0
      %573 = vmatpush2.msra.mxu0 0.0
      %574 = vmatprep.subr.mxu0 0.0
      %575 = vmatpush2.msra.mxu0 0.0
      %576 = vmatprep.subr.mxu0 0.0
      %577 = vmatpush2.msra.mxu0 0.0
      %578 = vmatprep.subr.mxu0 0.0
      %579 = vmatpush2.msra.mxu0 0.0
      %580 = vmatprep.subr.mxu0 0.0
      %581 = vmatpush2.msra.mxu0 0.0
      %582 = vmatprep.subr.mxu0 0.0
      %583 = vmatpush2.msra.mxu0 0.0
      %584 = vmatprep.subr.mxu0 0.0
      %585 = vmatpush2.msra.mxu0 0.0
      %586 = vmatprep.mubr.f32.mxu0 0.0
      %587 = vmatmul.mubr.f32.gmra.mxu0 %v520
      %v588 = vpop.f32.mrf.mxu0
      %v589 = vadd.f32 %v517, %v588
      %v590 = vpop.f32.mrf.mxu0
      %591 = vdwg.mxu0
      %592 = vst [vmem:[#allocation3] sm:$0x3] %v589
    $region37: #{tpu_custom_call.1} parent=1 // pred_fallthru
      _
    // Predicated region
    $region38: #{tpu_custom_call.1} parent=1 // pred_check
      _
    $region39: #{tpu_custom_call.1} parent=1 // pred_check_branch
      %594 = sbr.rel (0) target = $region41
    $region40: #{tpu_custom_call.1} parent=1 // pred_region
      %s596 = ssub.s32 32, 32
      %597 = vsyncadd [#allocation4], %s596
      %s599 = sshll.u32 [#allocation3], 4
      %s600 = int_to_ptr.vmem [resolvable:$true] %s599
      %602 = dma.vmem_to_hbm [thread:$0]  %s600, 32, %s7, [#allocation4]
    $region41: #{tpu_custom_call.1} parent=1 // pred_fallthru
      _
    // Predicated region
    $region42: #{tpu_custom_call.1} parent=1 // pred_check
      _
    $region43: #{tpu_custom_call.1} parent=1 // pred_check_branch
      %604 = sbr.rel (0) target = $region45
    $region44: #{tpu_custom_call.1} parent=1 // pred_region
      %605 = dma.done [#allocation4], 32
    $region45: #{tpu_custom_call.1} parent=1 // pred_fallthru
      _
    %606 = vsyncpa [#allocation4], 1

</llo_original>
